<compile_context>
chip_gen: v7x
topology: tpu7x:2x2x1
jax: 0.10.0
libtpu: 0.0.40
codegen_flags: <defaults>
</compile_context>

<pallas_src>
import jax
import jax.numpy as jnp
from jax import lax
from jax.experimental import pallas as pl
from jax.experimental.pallas import tpu as pltpu


def gin_kernel(eps_ref, x_ref, adj_ref, wt_ref, b_ref, h_out_ref, adj_out_ref):
    # eps_ref: SMEM (1,); x_ref: (TB, n_n, in_f); adj_ref: (TB, n_n, n_n)
    # wt_ref: (in_f, out_f)  [pre-transposed]; b_ref: (1, out_f)
    eps = eps_ref[0]
    tb, n_n, in_f = x_ref.shape
    out_f = wt_ref.shape[1]

    x = x_ref[...]
    adj = adj_ref[...]

    # Linear with batch folded into M: one (TB*n_n, in_f) @ (in_f, out_f) matmul.
    h2 = jnp.dot(x.reshape(tb * n_n, in_f), wt_ref[...],
                 preferred_element_type=jnp.float32)
    h2 = h2 + b_ref[...]                       # (1, out_f) broadcasts over rows
    h = h2.reshape(tb, n_n, out_f)             # back to (TB, n_n, out_f)

    # (adj + eps*I) @ h  ==  adj @ h + eps * h   -> MXU works on raw adj directly.
    agg = jnp.einsum('bnm,bmf->bnf', adj, h, preferred_element_type=jnp.float32)
    h_out_ref[...] = (agg + eps * h).astype(h_out_ref.dtype)

    # adj_ output: only the diagonal changes; single compare + select.
    rows = lax.broadcasted_iota(jnp.int32, (tb, n_n, n_n), 1)
    cols = lax.broadcasted_iota(jnp.int32, (tb, n_n, n_n), 2)
    adj_out_ref[...] = jnp.where(rows == cols, adj + eps, adj).astype(adj_out_ref.dtype)


def _pick_batch_tile(bs, n_n, in_f, out_f, itemsize=4, budget_bytes=8 << 20):
    # Per-batch VMEM footprint: x + adj + h_out + adj_out tiles; x2 for double buffering.
    per_batch = itemsize * n_n * (in_f + out_f + 2 * n_n)
    tb = max(1, min(bs, budget_bytes // max(1, 2 * per_batch)))
    while bs % tb:           # keep the grid exact (no ragged final step)
        tb -= 1
    return tb


def gin_forward(x, adj, w, b, eps):
    bs, n_n, in_f = x.shape
    out_f = w.shape[0]

    w_t = jnp.asarray(w).T.copy()              # (in_f, out_f): transpose once, outside the kernel
    b2 = jnp.asarray(b).reshape(1, out_f)
    eps1 = jnp.asarray(eps).reshape(1).astype(jnp.float32)

    itemsize = jnp.dtype(x.dtype).itemsize
    tb = _pick_batch_tile(bs, n_n, in_f, out_f, itemsize)
    grid = (bs // tb,)

    flops = 2 * bs * n_n * out_f * (in_f + n_n + 1)
    bytes_accessed = itemsize * (x.size + adj.size + w_t.size + b2.size
                                 + bs * n_n * out_f + bs * n_n * n_n)

    h_out, adj_out = pl.pallas_call(
        gin_kernel,
        out_shape=(
            jax.ShapeDtypeStruct((bs, n_n, out_f), x.dtype),
            jax.ShapeDtypeStruct((bs, n_n, n_n), adj.dtype),
        ),
        grid=grid,
        in_specs=[
            pl.BlockSpec(memory_space=pltpu.SMEM),                       # eps scalar
            pl.BlockSpec((tb, n_n, in_f), lambda i: (i, 0, 0)),          # x (batch-blocked)
            pl.BlockSpec((tb, n_n, n_n), lambda i: (i, 0, 0)),           # adj (batch-blocked)
            pl.BlockSpec((in_f, out_f), lambda i: (0, 0)),               # W^T (loop-invariant)
            pl.BlockSpec((1, out_f), lambda i: (0, 0)),                  # bias
        ],
        out_specs=(
            pl.BlockSpec((tb, n_n, out_f), lambda i: (i, 0, 0)),
            pl.BlockSpec((tb, n_n, n_n), lambda i: (i, 0, 0)),
        ),
        compiler_params=pltpu.CompilerParams(dimension_semantics=("parallel",)),
        cost_estimate=pl.CostEstimate(flops=flops, transcendentals=0,
                                      bytes_accessed=bytes_accessed),
    )(eps1, x, adj, w_t, b2)

    # matches PyTorch: return (x, adj_.unsqueeze(1))
    return h_out, adj_out[:, None, :, :]


if __name__ == "__main__":
    bs, n_n, in_f, out_f = 2, 8, 4, 32

    key = jax.random.PRNGKey(0)
    k1, k2, k3, k4 = jax.random.split(key, 4)

    x = jax.random.normal(k1, (bs, n_n, in_f), jnp.float32)
    adj = (jax.random.uniform(k2, (bs, n_n, n_n)) > 0.5).astype(jnp.float32)

    # nn.Linear-style init (uniform bound 1/sqrt(in_f))
    bound = 1.0 / (in_f ** 0.5)
    w = jax.random.uniform(k3, (out_f, in_f), jnp.float32, -bound, bound)
    b = jax.random.uniform(k4, (out_f,), jnp.float32, -bound, bound)
    # module default is eps = zeros(1); use a nonzero value here to exercise the diag path
    eps = jnp.full((1,), 0.25, jnp.float32)

    h, adj_out = gin_forward(x, adj, w, b, eps)
    jax.block_until_ready((h, adj_out))

    # pure-JAX reference check
    adj_ref = adj + jnp.eye(n_n, dtype=jnp.float32)[None] * eps[0]
    h_ref = jnp.einsum('bnm,bmf->bnf', adj_ref, x @ w.T + b)
    assert h.shape == (bs, n_n, out_f)
    assert adj_out.shape == (bs, 1, n_n, n_n)
    assert jnp.allclose(h, h_ref, atol=1e-5)
    assert jnp.allclose(adj_out, adj_ref[:, None], atol=1e-6)

    print("KERNEL_OK")
</pallas_src>

<mosaic_0001>
module attributes {stable_mosaic.version = 11 : i64} {
  func.func @gin_kernel(%arg0: i32, %arg1: memref<1xf32, #tpu.memory_space<smem>>, %arg2: memref<2x8x4xf32, #tpu.memory_space<vmem>>, %arg3: memref<2x8x8xf32, #tpu.memory_space<vmem>>, %arg4: memref<4x32xf32, #tpu.memory_space<vmem>>, %arg5: memref<1x32xf32, #tpu.memory_space<vmem>>, %arg6: memref<2x8x32xf32, #tpu.memory_space<vmem>>, %arg7: memref<2x8x8xf32, #tpu.memory_space<vmem>>) attributes {dimension_semantics = [#tpu.dimension_semantics<parallel>], iteration_bounds = array<i64: 1>, scalar_prefetch = 0 : i64, scratch_operands = 0 : i64, tpu.core_type = #tpu.core_type<tc>, window_params = [{transform_indices = @transform_0, window_bounds = array<i64: 1>}, {transform_indices = @transform_1, window_bounds = array<i64: 2, 8, 4>}, {transform_indices = @transform_2, window_bounds = array<i64: 2, 8, 8>}, {pipeline_mode = #tpu.pipeline_mode<synchronous>, transform_indices = @transform_3, window_bounds = array<i64: 4, 32>}, {pipeline_mode = #tpu.pipeline_mode<synchronous>, transform_indices = @transform_4, window_bounds = array<i64: 1, 32>}, {transform_indices = @transform_5, window_bounds = array<i64: 2, 8, 32>}, {transform_indices = @transform_6, window_bounds = array<i64: 2, 8, 8>}]} {
    %c0 = arith.constant 0 : index
    %0 = memref.load %arg1[%c0] : memref<1xf32, #tpu.memory_space<smem>>
    %c0_0 = arith.constant 0 : index
    %c0_1 = arith.constant 0 : index
    %c0_2 = arith.constant 0 : index
    %1 = vector.load %arg2[%c0_0, %c0_1, %c0_2] : memref<2x8x4xf32, #tpu.memory_space<vmem>>, vector<2x8x4xf32>
    %c0_3 = arith.constant 0 : index
    %c0_4 = arith.constant 0 : index
    %c0_5 = arith.constant 0 : index
    %2 = vector.load %arg3[%c0_3, %c0_4, %c0_5] : memref<2x8x8xf32, #tpu.memory_space<vmem>>, vector<2x8x8xf32>
    %3 = vector.shape_cast %1 : vector<2x8x4xf32> to vector<16x4xf32>
    %c0_6 = arith.constant 0 : index
    %c0_7 = arith.constant 0 : index
    %4 = vector.load %arg4[%c0_6, %c0_7] : memref<4x32xf32, #tpu.memory_space<vmem>>, vector<4x32xf32>
    %cst = arith.constant dense<0.000000e+00> : vector<16x32xf32>
    %5 = tpu.matmul %3, %4, %cst {dimension_numbers = #tpu.dot_dimension_numbers<[1], [0], [0], [1], [0, 0, 1, 1], [], []>} : vector<16x4xf32>, vector<4x32xf32>, vector<16x32xf32> -> vector<16x32xf32>
    %c0_8 = arith.constant 0 : index
    %c0_9 = arith.constant 0 : index
    %6 = vector.load %arg5[%c0_8, %c0_9] : memref<1x32xf32, #tpu.memory_space<vmem>>, vector<1x32xf32>
    %7 = vector.broadcast %6 : vector<1x32xf32> to vector<16x32xf32>
    %8 = arith.addf %5, %7 : vector<16x32xf32>
    %9 = vector.shape_cast %8 : vector<16x32xf32> to vector<2x8x32xf32>
    "tpu.trace_start"() <{level = 10 : i32, message = "bnm,bmf->bnf"}> : () -> ()
    %cst_10 = arith.constant dense<0.000000e+00> : vector<2x8x32xf32>
    %10 = tpu.matmul %2, %9, %cst_10 {dimension_numbers = #tpu.dot_dimension_numbers<[2], [1], [1], [2], [0, 0, 0, 1, 1, 2], [0], [0]>} : vector<2x8x8xf32>, vector<2x8x32xf32>, vector<2x8x32xf32> -> vector<2x8x32xf32>
    "tpu.trace_stop"() : () -> ()
    %11 = vector.broadcast %0 : f32 to vector<2x8x32xf32>
    %12 = arith.mulf %11, %9 : vector<2x8x32xf32>
    %13 = arith.addf %10, %12 : vector<2x8x32xf32>
    %c0_11 = arith.constant 0 : index
    %c0_12 = arith.constant 0 : index
    %c0_13 = arith.constant 0 : index
    %14 = vector.load %arg6[%c0_11, %c0_12, %c0_13] : memref<2x8x32xf32, #tpu.memory_space<vmem>>, vector<2x8x32xf32>
    tpu.vector_store %arg6[%c0_11, %c0_12, %c0_13], %13 {strides = array<i32>} : memref<2x8x32xf32, #tpu.memory_space<vmem>>, vector<2x8x32xf32>,
    %15 = tpu.iota {dimensions = array<i32: 1>} : vector<2x8x8xi32>
    %16 = tpu.iota {dimensions = array<i32: 2>} : vector<2x8x8xi32>
    %17 = arith.cmpi eq, %15, %16 : vector<2x8x8xi32>
    %18 = vector.broadcast %0 : f32 to vector<2x8x8xf32>
    %19 = arith.addf %2, %18 : vector<2x8x8xf32>
    %20 = arith.select %17, %19, %2 : vector<2x8x8xi1>, vector<2x8x8xf32>
    %c0_14 = arith.constant 0 : index
    %c0_15 = arith.constant 0 : index
    %c0_16 = arith.constant 0 : index
    %21 = vector.load %arg7[%c0_14, %c0_15, %c0_16] : memref<2x8x8xf32, #tpu.memory_space<vmem>>, vector<2x8x8xf32>
    tpu.vector_store %arg7[%c0_14, %c0_15, %c0_16], %20 {strides = array<i32>} : memref<2x8x8xf32, #tpu.memory_space<vmem>>, vector<2x8x8xf32>,
    return
  }
  func.func @transform_0(%arg0: i32) -> i32 {
    %c0_i32 = arith.constant 0 : i32
    %c0_i32_0 = arith.constant 0 : i32
    return %c0_i32 : i32
  }
  func.func @transform_1(%arg0: i32) -> (i32, i32, i32) {
    %c0_i32 = arith.constant 0 : i32
    %c0_i32_0 = arith.constant 0 : i32
    %c0_i32_1 = arith.constant 0 : i32
    return %arg0, %c0_i32, %c0_i32_0 : i32, i32, i32
  }
  func.func @transform_2(%arg0: i32) -> (i32, i32, i32) {
    %c0_i32 = arith.constant 0 : i32
    %c0_i32_0 = arith.constant 0 : i32
    %c0_i32_1 = arith.constant 0 : i32
    return %arg0, %c0_i32, %c0_i32_0 : i32, i32, i32
  }
  func.func @transform_3(%arg0: i32) -> (i32, i32) {
    %c0_i32 = arith.constant 0 : i32
    %c0_i32_0 = arith.constant 0 : i32
    %c0_i32_1 = arith.constant 0 : i32
    return %c0_i32, %c0_i32_0 : i32, i32
  }
  func.func @transform_4(%arg0: i32) -> (i32, i32) {
    %c0_i32 = arith.constant 0 : i32
    %c0_i32_0 = arith.constant 0 : i32
    %c0_i32_1 = arith.constant 0 : i32
    return %c0_i32, %c0_i32_0 : i32, i32
  }
  func.func @transform_5(%arg0: i32) -> (i32, i32, i32) {
    %c0_i32 = arith.constant 0 : i32
    %c0_i32_0 = arith.constant 0 : i32
    %c0_i32_1 = arith.constant 0 : i32
    return %arg0, %c0_i32, %c0_i32_0 : i32, i32, i32
  }
  func.func @transform_6(%arg0: i32) -> (i32, i32, i32) {
    %c0_i32 = arith.constant 0 : i32
    %c0_i32_0 = arith.constant 0 : i32
    %c0_i32_1 = arith.constant 0 : i32
    return %arg0, %c0_i32, %c0_i32_0 : i32, i32, i32
  }
}

</mosaic_0001>

<llo_original>
// kernel: tpu_custom_call.1
$region0: #{tpu_custom_call.1}
  #allocation0 [shape = 'u32[]', space=smem, size = 0x4, offset = 0x4, fixed_abs, tag = 'smem constant byte address 0x4 - core index']
  #allocation1 [shape = 'u32[144,128]{1,0:T(1,128)}', space=vmem, size = 0x12000, scoped, tag = 'internal scratch']
  #allocation2 [shape = 'f32[1]{0:T(128)S(6)}', space=smem, size = 0x200, scoped, tag = 'scoped memory for tpu_custom_call.1']
  %s0 = inlined_call_operand.<no memory space> [shape: f32[1], index: 0, kind: input, shape index: {}]
  %s1 = inlined_call_operand.vmem [shape: f32[2,8,4], index: 1, kind: input, shape index: {}]
  %s2 = inlined_call_operand.vmem [shape: f32[2,8,8], index: 2, kind: input, shape index: {}]
  %s3 = inlined_call_operand.vmem [shape: f32[4,32], index: 3, kind: input, shape index: {}]
  %s4 = inlined_call_operand.vmem [shape: f32[1,32], index: 4, kind: input, shape index: {}]
  %s5 = inlined_call_operand.hbm [shape: f32[2,8,32], index: 5, kind: output, shape index: {0}]
  %s6 = inlined_call_operand.hbm [shape: f32[2,8,8], index: 6, kind: output, shape index: {1}]
  %7 = xla_tuple %s5, %s6
  %s8 = sld [smem:[#allocation0]]
  $region38: #{tpu_custom_call.1} parent=0
    _
  %s10 = ssub.s32 1, %s8
  %s11 = scalar_select 0, %s10, %s8
  %12 = sst [smem:[#allocation2]] %s0
  $region1: #{tpu_custom_call.1} parent=0
    #allocation3 [shape = 'u8[8192]{0}', space=vmem, size = 0x2000, scoped, tag = 'output window, operand 0, single buffered']
    #allocation4 [shape = 's32[1]{0}', space=sflag, size = 0x4, scoped, tag = 'scoped memory for tpu_custom_call.1']
    #allocation5 [shape = 'u8[8192]{0}', space=vmem, size = 0x2000, scoped, tag = 'output window, operand 1, single buffered']
    #allocation6 [shape = 's32[1]{0}', space=sflag, size = 0x4, scoped, tag = 'scoped memory for tpu_custom_call.1']
    %13 = vsyncpa [#allocation4], 0
    %14 = vsyncpa [#allocation6], 0
    // Predicated region
    $region2: #{tpu_custom_call.1} parent=1 // pred_check
      _
    $region3: #{tpu_custom_call.1} parent=1 // pred_check_branch
      %16 = sbr.rel (0) target = $region5
    $region4: #{tpu_custom_call.1} parent=1 // pred_region
      _
    $region5: #{tpu_custom_call.1} parent=1 // pred_fallthru
      _
    // Predicated region
    $region6: #{tpu_custom_call.1} parent=1 // pred_check
      _
    $region7: #{tpu_custom_call.1} parent=1 // pred_check_branch
      %18 = sbr.rel (0) target = $region9
    $region8: #{tpu_custom_call.1} parent=1 // pred_region
      _
    $region9: #{tpu_custom_call.1} parent=1 // pred_fallthru
      _
    // Predicated region
    $region10: #{tpu_custom_call.1} parent=1 // pred_check
      _
    $region11: #{tpu_custom_call.1} parent=1 // pred_check_branch
      %20 = sbr.rel (0) target = $region13
    $region12: #{tpu_custom_call.1} parent=1 // pred_region
      _
    $region13: #{tpu_custom_call.1} parent=1 // pred_fallthru
      _
    // Predicated region
    $region14: #{tpu_custom_call.1} parent=1 // pred_check
      _
    $region15: #{tpu_custom_call.1} parent=1 // pred_check_branch
      %22 = sbr.rel (0) target = $region17
    $region16: #{tpu_custom_call.1} parent=1 // pred_region
      _
    $region17: #{tpu_custom_call.1} parent=1 // pred_fallthru
      _
    // Predicated region
    $region18: #{tpu_custom_call.1} parent=1 // pred_check
      _
    $region19: #{tpu_custom_call.1} parent=1 // pred_check_branch
      %24 = sbr.rel (0) target = $region21
    $region20: #{tpu_custom_call.1} parent=1 // pred_region
      _
    $region21: #{tpu_custom_call.1} parent=1 // pred_fallthru
      _
    %s25 = sld [smem:[#allocation2]]
    %v26 = vld [vmem:[%s1] sm:$0xff]
    %v27 = vld [vmem:[%s1 + $0x8] sm:$0xff]
    %v28 = vld [vmem:[%s2] sm:$0xff]
    %v29 = vld [vmem:[%s2 + $0x8] sm:$0xff]
    %v30 = vld [vmem:[%s3] sm:$0xf]
    %v31 = vld [vmem:[%s4] sm:$0x1]
    %v33 = vlaneseq
    %v34 = vshrl.u32 %v33, 7
    %v35 = vsub.s32 0, %v34
    %v36 = vrot.slane %v31, %v35
    %vm38 = vcmask 31744
    %v40 = vsel %vm38, %v26, 0
    %v43 = vsel %vm38, %v27, 0
    %vm45 = vcmask 1043456
    %v47 = vsel %vm45, %v30, 0
    %49 = vmatprep.subr.mxu0 0.0
    %50 = vmatpush1.msra.mxu0 %v47
    %51 = vmatprep.subr.mxu0 0.0
    %52 = vmatpush1.msra.mxu0 0.0
    %53 = vmatprep.subr.mxu0 0.0
    %54 = vmatpush1.msra.mxu0 0.0
    %55 = vmatprep.subr.mxu0 0.0
    %56 = vmatpush1.msra.mxu0 0.0
    %57 = vmatprep.subr.mxu0 0.0
    %58 = vmatpush1.msra.mxu0 0.0
    %59 = vmatprep.subr.mxu0 0.0
    %60 = vmatpush1.msra.mxu0 0.0
    %61 = vmatprep.subr.mxu0 0.0
    %62 = vmatpush1.msra.mxu0 0.0
    %63 = vmatprep.subr.mxu0 0.0
    %64 = vmatpush1.msra.mxu0 0.0
    %65 = vmatprep.subr.mxu0 0.0
    %66 = vmatpush1.msra.mxu0 0.0
    %67 = vmatprep.subr.mxu0 0.0
    %68 = vmatpush1.msra.mxu0 0.0
    %69 = vmatprep.subr.mxu0 0.0
    %70 = vmatpush1.msra.mxu0 0.0
    %71 = vmatprep.subr.mxu0 0.0
    %72 = vmatpush1.msra.mxu0 0.0
    %73 = vmatprep.subr.mxu0 0.0
    %74 = vmatpush1.msra.mxu0 0.0
    %75 = vmatprep.subr.mxu0 0.0
    %76 = vmatpush1.msra.mxu0 0.0
    %77 = vmatprep.subr.mxu0 0.0
    %78 = vmatpush1.msra.mxu0 0.0
    %79 = vmatprep.subr.mxu0 0.0
    %80 = vmatpush1.msra.mxu0 0.0
    %81 = vmatprep.subr.mxu0 0.0
    %82 = vmatpush1.msra.mxu0 0.0
    %83 = vmatprep.subr.mxu0 0.0
    %84 = vmatpush1.msra.mxu0 0.0
    %85 = vmatprep.subr.mxu0 0.0
    %86 = vmatpush1.msra.mxu0 0.0
    %87 = vmatprep.subr.mxu0 0.0
    %88 = vmatpush1.msra.mxu0 0.0
    %89 = vmatprep.subr.mxu0 0.0
    %90 = vmatpush1.msra.mxu0 0.0
    %91 = vmatprep.subr.mxu0 0.0
    %92 = vmatpush1.msra.mxu0 0.0
    %93 = vmatprep.subr.mxu0 0.0
    %94 = vmatpush1.msra.mxu0 0.0
    %95 = vmatprep.subr.mxu0 0.0
    %96 = vmatpush1.msra.mxu0 0.0
    %97 = vmatprep.subr.mxu0 0.0
    %98 = vmatpush1.msra.mxu0 0.0
    %99 = vmatprep.subr.mxu0 0.0
    %100 = vmatpush1.msra.mxu0 0.0
    %101 = vmatprep.subr.mxu0 0.0
    %102 = vmatpush1.msra.mxu0 0.0
    %103 = vmatprep.subr.mxu0 0.0
    %104 = vmatpush1.msra.mxu0 0.0
    %105 = vmatprep.subr.mxu0 0.0
    %106 = vmatpush1.msra.mxu0 0.0
    %107 = vmatprep.subr.mxu0 0.0
    %108 = vmatpush1.msra.mxu0 0.0
    %109 = vmatprep.subr.mxu0 0.0
    %110 = vmatpush1.msra.mxu0 0.0
    %111 = vmatprep.subr.mxu0 0.0
    %112 = vmatpush1.msra.mxu0 0.0
    %113 = vmatprep.mubr.f32.mxu0 0.0
    %114 = vmatmul.mubr.f32.gmra.mrb[0].mxu0 %v40
    %v115 = vpop.f32.mrb[0].mxu0
    %v116 = vadd.f32 %v36, %v115
    %v117 = vpop.f32.mrb[0].mxu0
    %118 = vmatprep.mubr.f32.mxu0 0.0
    %119 = vmatmul.mubr.f32.gmra.mrb[0].mxu0 %v43
    %v120 = vpop.f32.mrb[0].mxu0
    %v121 = vadd.f32 %v36, %v120
    %v122 = vpop.f32.mrb[0].mxu0
    %123 = vdwg.mxu0
    %v124 = vstv %s25
    %v125 = vmul.f32 %v124, %v116
    %v126 = vmul.f32 %v124, %v121
    %vm127 = vcmask 64512
    %v129 = vsel %vm127, %v28, 0
    %131 = vmatprep.subr.mxu0 0.0
    %132 = vmatpush1.msra.mxu0 %v116
    %133 = vmatprep.subr.mxu0 0.0
    %134 = vmatpush1.msra.mxu0 0.0
    %135 = vmatprep.subr.mxu0 0.0
    %136 = vmatpush1.msra.mxu0 0.0
    %137 = vmatprep.subr.mxu0 0.0
    %138 = vmatpush1.msra.mxu0 0.0
    %139 = vmatprep.subr.mxu0 0.0
    %140 = vmatpush1.msra.mxu0 0.0
    %141 = vmatprep.subr.mxu0 0.0
    %142 = vmatpush1.msra.mxu0 0.0
    %143 = vmatprep.subr.mxu0 0.0
    %144 = vmatpush1.msra.mxu0 0.0
    %145 = vmatprep.subr.mxu0 0.0
    %146 = vmatpush1.msra.mxu0 0.0
    %147 = vmatprep.subr.mxu0 0.0
    %148 = vmatpush1.msra.mxu0 0.0
    %149 = vmatprep.subr.mxu0 0.0
    %150 = vmatpush1.msra.mxu0 0.0
    %151 = vmatprep.subr.mxu0 0.0
    %152 = vmatpush1.msra.mxu0 0.0
    %153 = vmatprep.subr.mxu0 0.0
    %154 = vmatpush1.msra.mxu0 0.0
    %155 = vmatprep.subr.mxu0 0.0
    %156 = vmatpush1.msra.mxu0 0.0
    %157 = vmatprep.subr.mxu0 0.0
    %158 = vmatpush1.msra.mxu0 0.0
    %159 = vmatprep.subr.mxu0 0.0
    %160 = vmatpush1.msra.mxu0 0.0
    %161 = vmatprep.subr.mxu0 0.0
    %162 = vmatpush1.msra.mxu0 0.0
    %163 = vmatprep.subr.mxu0 0.0
    %164 = vmatpush1.msra.mxu0 0.0
    %165 = vmatprep.subr.mxu0 0.0
    %166 = vmatpush1.msra.mxu0 0.0
    %167 = vmatprep.subr.mxu0 0.0
    %168 = vmatpush1.msra.mxu0 0.0
    %169 = vmatprep.subr.mxu0 0.0
    %170 = vmatpush1.msra.mxu0 0.0
    %171 = vmatprep.subr.mxu0 0.0
    %172 = vmatpush1.msra.mxu0 0.0
    %173 = vmatprep.subr.mxu0 0.0
    %174 = vmatpush1.msra.mxu0 0.0
    %175 = vmatprep.subr.mxu0 0.0
    %176 = vmatpush1.msra.mxu0 0.0
    %177 = vmatprep.subr.mxu0 0.0
    %178 = vmatpush1.msra.mxu0 0.0
    %179 = vmatprep.subr.mxu0 0.0
    %180 = vmatpush1.msra.mxu0 0.0
    %181 = vmatprep.subr.mxu0 0.0
    %182 = vmatpush1.msra.mxu0 0.0
    %183 = vmatprep.subr.mxu0 0.0
    %184 = vmatpush1.msra.mxu0 0.0
    %185 = vmatprep.subr.mxu0 0.0
    %186 = vmatpush1.msra.mxu0 0.0
    %187 = vmatprep.subr.mxu0 0.0
    %188 = vmatpush1.msra.mxu0 0.0
    %189 = vmatprep.subr.mxu0 0.0
    %190 = vmatpush1.msra.mxu0 0.0
    %191 = vmatprep.subr.mxu0 0.0
    %192 = vmatpush1.msra.mxu0 0.0
    %193 = vmatprep.subr.mxu0 0.0
    %194 = vmatpush1.msra.mxu0 0.0
    %195 = vmatprep.mubr.f32.mxu0 0.0
    %196 = vmatmul.mubr.f32.gmra.mrb[0].mxu0 %v129
    %v197 = vpop.f32.mrb[0].mxu0
    %v198 = vadd.f32 %v125, %v197
    %v199 = vpop.f32.mrb[0].mxu0
    %200 = vdwg.mxu0
    %v202 = vsel %vm127, %v29, 0
    %204 = vmatprep.subr.mxu0 0.0
    %205 = vmatpush1.msra.mxu0 %v121
    %206 = vmatprep.subr.mxu0 0.0
    %207 = vmatpush1.msra.mxu0 0.0
    %208 = vmatprep.subr.mxu0 0.0
    %209 = vmatpush1.msra.mxu0 0.0
    %210 = vmatprep.subr.mxu0 0.0
    %211 = vmatpush1.msra.mxu0 0.0
    %212 = vmatprep.subr.mxu0 0.0
    %213 = vmatpush1.msra.mxu0 0.0
    %214 = vmatprep.subr.mxu0 0.0
    %215 = vmatpush1.msra.mxu0 0.0
    %216 = vmatprep.subr.mxu0 0.0
    %217 = vmatpush1.msra.mxu0 0.0
    %218 = vmatprep.subr.mxu0 0.0
    %219 = vmatpush1.msra.mxu0 0.0
    %220 = vmatprep.subr.mxu0 0.0
    %221 = vmatpush1.msra.mxu0 0.0
    %222 = vmatprep.subr.mxu0 0.0
    %223 = vmatpush1.msra.mxu0 0.0
    %224 = vmatprep.subr.mxu0 0.0
    %225 = vmatpush1.msra.mxu0 0.0
    %226 = vmatprep.subr.mxu0 0.0
    %227 = vmatpush1.msra.mxu0 0.0
    %228 = vmatprep.subr.mxu0 0.0
    %229 = vmatpush1.msra.mxu0 0.0
    %230 = vmatprep.subr.mxu0 0.0
    %231 = vmatpush1.msra.mxu0 0.0
    %232 = vmatprep.subr.mxu0 0.0
    %233 = vmatpush1.msra.mxu0 0.0
    %234 = vmatprep.subr.mxu0 0.0
    %235 = vmatpush1.msra.mxu0 0.0
    %236 = vmatprep.subr.mxu0 0.0
    %237 = vmatpush1.msra.mxu0 0.0
    %238 = vmatprep.subr.mxu0 0.0
    %239 = vmatpush1.msra.mxu0 0.0
    %240 = vmatprep.subr.mxu0 0.0
    %241 = vmatpush1.msra.mxu0 0.0
    %242 = vmatprep.subr.mxu0 0.0
    %243 = vmatpush1.msra.mxu0 0.0
    %244 = vmatprep.subr.mxu0 0.0
    %245 = vmatpush1.msra.mxu0 0.0
    %246 = vmatprep.subr.mxu0 0.0
    %247 = vmatpush1.msra.mxu0 0.0
    %248 = vmatprep.subr.mxu0 0.0
    %249 = vmatpush1.msra.mxu0 0.0
    %250 = vmatprep.subr.mxu0 0.0
    %251 = vmatpush1.msra.mxu0 0.0
    %252 = vmatprep.subr.mxu0 0.0
    %253 = vmatpush1.msra.mxu0 0.0
    %254 = vmatprep.subr.mxu0 0.0
    %255 = vmatpush1.msra.mxu0 0.0
    %256 = vmatprep.subr.mxu0 0.0
    %257 = vmatpush1.msra.mxu0 0.0
    %258 = vmatprep.subr.mxu0 0.0
    %259 = vmatpush1.msra.mxu0 0.0
    %260 = vmatprep.subr.mxu0 0.0
    %261 = vmatpush1.msra.mxu0 0.0
    %262 = vmatprep.subr.mxu0 0.0
    %263 = vmatpush1.msra.mxu0 0.0
    %264 = vmatprep.subr.mxu0 0.0
    %265 = vmatpush1.msra.mxu0 0.0
    %266 = vmatprep.subr.mxu0 0.0
    %267 = vmatpush1.msra.mxu0 0.0
    %268 = vmatprep.mubr.f32.mxu0 0.0
    %269 = vmatmul.mubr.f32.gmra.mrb[0].mxu0 %v202
    %v270 = vpop.f32.mrb[0].mxu0
    %v271 = vadd.f32 %v126, %v270
    %v272 = vpop.f32.mrb[0].mxu0
    %273 = vdwg.mxu0
    %vm274 = vcmask 261120
    %275 = vst.msk [vmem:[#allocation3] sm:$0xff] %vm274, %v198
    %276 = vst.msk [vmem:[#allocation3 + $0x8] sm:$0xff] %vm274, %v271
    %v277 = vlaneseq
    %v278 = vshrl.u32 %v277, 7
    %v279 = vlaneseq
    %v280 = vand.u32 %v279, 127
    %vm281 = vcmp.eq.s32.totalorder %v278, %v280
    %v282 = vadd.f32 %v28, %v124
    %v283 = vadd.f32 %v29, %v124
    %v284 = vsel %vm281, %v282, %v28
    %v285 = vsel %vm281, %v283, %v29
    %286 = vst.msk [vmem:[#allocation5] sm:$0xff] %vm127, %v284
    %287 = vst.msk [vmem:[#allocation5 + $0x8] sm:$0xff] %vm127, %v285
    // Predicated region
    $region22: #{tpu_custom_call.1} parent=1 // pred_check
      _
    $region23: #{tpu_custom_call.1} parent=1 // pred_check_branch
      %289 = sbr.rel (0) target = $region25
    $region24: #{tpu_custom_call.1} parent=1 // pred_region
      %s291 = ssub.s32 256, 256
      %292 = vsyncadd [#allocation4], %s291
      %s293 = sshll.u32 [#allocation3], 4
      %s294 = int_to_ptr.vmem [resolvable:$true] %s293
      %299 = dma.vmem_to_hbm [thread:$0]  %s294, 256, %s5, [#allocation4], 128, 128, 8
    $region25: #{tpu_custom_call.1} parent=1 // pred_fallthru
      _
    // Predicated region
    $region26: #{tpu_custom_call.1} parent=1 // pred_check
      _
    $region27: #{tpu_custom_call.1} parent=1 // pred_check_branch
      %301 = sbr.rel (0) target = $region29
    $region28: #{tpu_custom_call.1} parent=1 // pred_region
      %s303 = ssub.s32 256, 256
      %304 = vsyncadd [#allocation6], %s303
      %s305 = sshll.u32 [#allocation5], 4
      %s306 = int_to_ptr.vmem [resolvable:$true] %s305
      %311 = dma.vmem_to_hbm [thread:$0]  %s306, 256, %s6, [#allocation6], 128, 128, 8
    $region29: #{tpu_custom_call.1} parent=1 // pred_fallthru
      _
    // Predicated region
    $region30: #{tpu_custom_call.1} parent=1 // pred_check
      _
    $region31: #{tpu_custom_call.1} parent=1 // pred_check_branch
      %313 = sbr.rel (0) target = $region33
    $region32: #{tpu_custom_call.1} parent=1 // pred_region
      %314 = dma.done [#allocation4], 256
    $region33: #{tpu_custom_call.1} parent=1 // pred_fallthru
      _
    // Predicated region
    $region34: #{tpu_custom_call.1} parent=1 // pred_check
      _
    $region35: #{tpu_custom_call.1} parent=1 // pred_check_branch
      %316 = sbr.rel (0) target = $region37
    $region36: #{tpu_custom_call.1} parent=1 // pred_region
      %317 = dma.done [#allocation6], 256
    $region37: #{tpu_custom_call.1} parent=1 // pred_fallthru
      _
    %318 = vsyncpa [#allocation4], 1
    %319 = vsyncpa [#allocation6], 1

</llo_original>
